<compile_context>
chip_gen: v7x
topology: tpu7x:2x2x1
jax: 0.10.0
libtpu: 0.0.40
codegen_flags: <defaults>
</compile_context>

<pallas_src>
import math

import jax
import jax.numpy as jnp
from jax.experimental import pallas as pl
from jax.experimental.pallas import tpu as pltpu

_LANE = 128


def _round_up(x, m):
    return ((x + m - 1) // m) * m


# ---------------------------------------------------------------------------
# Fused kernel:  out = hidden @ W_h  +  one_hot(tag) @ R
#                with R = tag_emb @ W_e.T + b precomputed (bias folded in).
# ---------------------------------------------------------------------------
def _seq_correct_kernel(tag_ref, hidden_ref, wh_ref, r_ref, out_ref):
    # tag_ref:    (TB, 1)      int32      tag indices
    # hidden_ref: (TB, H)      bfloat16   LSTM hidden states
    # wh_ref:     (H, Tpad)    bfloat16   hidden half of linear weight (padded)
    # r_ref:      (Tset, Tpad) bfloat16   fused per-tag rows (emb@W_e.T + b)
    # out_ref:    (TB, T)      float32    exact-width output (masked store)
    tb = tag_ref.shape[0]
    n_tags = r_ref.shape[0]
    t_out = out_ref.shape[1]

    # One-hot "gather" of the fused per-tag rows.  Built in int32/f32 on the
    # VPU; only the MXU operand is cast to bf16 (exact for {0, 1}).
    # TODO(synk): for large tagset_size (>= ~512) replace this one-hot matmul
    # with a scalar-prefetched gather of R rows.
    tag = tag_ref[...]                                             # (TB, 1)
    iota = jax.lax.broadcasted_iota(jnp.int32, (tb, n_tags), 1)    # (TB, Tset)
    one_hot = jnp.where(iota == tag, 1.0, 0.0).astype(jnp.bfloat16)

    # bf16 MXU operands, f32 accumulation.
    acc = jnp.dot(hidden_ref[...], wh_ref[...],
                  preferred_element_type=jnp.float32)              # (TB, Tpad)
    acc = acc + jnp.dot(one_hot, r_ref[...],
                        preferred_element_type=jnp.float32)        # (TB, Tpad)

    # TODO(synk): apply dropout(p=0.5) when is_train=True (eval path only).
    out_ref[...] = acc[:, :t_out]                                  # (TB, T)


# ---------------------------------------------------------------------------
# One-time parameter preparation (hoisted off the per-call path)
# ---------------------------------------------------------------------------
def prepare_params(params):
    w = jnp.asarray(params["w"], jnp.float32)          # (T, H + P)  PyTorch layout
    b = jnp.asarray(params["b"], jnp.float32)          # (T,)
    emb = jnp.asarray(params["tag_emb"], jnp.float32)  # (Tset == T, P)
    T, HP = w.shape
    P = emb.shape[1]
    H = HP - P
    t_pad = _round_up(max(T, _LANE), _LANE)

    w_h = w[:, :H].T                                   # (H, T)
    w_e = w[:, H:].T                                   # (P, T)
    # Fold the embedding lookup and the bias into per-tag rows.  one_hot rows
    # sum to 1, so adding b here is exact.
    r = emb @ w_e + b[None, :]                         # (Tset, T)

    wh_pad = jnp.zeros((H, t_pad), jnp.float32).at[:, :T].set(w_h)
    r_pad = jnp.zeros((emb.shape[0], t_pad), jnp.float32).at[:, :T].set(r)
    return dict(
        wh_pad=wh_pad.astype(jnp.bfloat16),            # (H, Tpad)
        r_pad=r_pad.astype(jnp.bfloat16),              # (Tset, Tpad)
        tagset_size=T,
        hidden_dim=H,
    )


# ---------------------------------------------------------------------------
# Forward pass
# ---------------------------------------------------------------------------
def pallas_forward(hidden, tag, prep, is_train=False, row_block=256):
    # Eval path only (dropout p=0 == identity); see TODO in the kernel.
    del is_train
    B, S, H = hidden.shape
    assert H == prep["hidden_dim"]
    T = prep["tagset_size"]
    wh_pad = prep["wh_pad"]
    r_pad = prep["r_pad"]
    t_pad = wh_pad.shape[1]
    n_tags = r_pad.shape[0]

    BS = B * S
    # Row block: multiple of 8 sublanes; capped so the double-buffered
    # (TB,H)+(TB,T) footprint stays tiny even under v7x's 32 MiB scoped VMEM.
    tb = min(row_block, _round_up(BS, 8))
    bs_pad = _round_up(BS, tb)

    # bf16 ingest (in a real pipeline hidden already arrives as bf16 from the
    # producing layer; under jit this cast fuses with the producer).
    hidden_2d = hidden.reshape(BS, H).astype(jnp.bfloat16)
    # Clamp out-of-range tags instead of silently zeroing embedding + bias.
    tag_2d = jnp.clip(tag.reshape(BS, 1).astype(jnp.int32), 0, n_tags - 1)
    if bs_pad != BS:
        hidden_2d = jnp.pad(hidden_2d, ((0, bs_pad - BS), (0, 0)))
        tag_2d = jnp.pad(tag_2d, ((0, bs_pad - BS), (0, 0)))

    out = pl.pallas_call(
        _seq_correct_kernel,
        out_shape=jax.ShapeDtypeStruct((bs_pad, T), jnp.float32),
        grid_spec=pltpu.PrefetchScalarGridSpec(
            num_scalar_prefetch=0,
            grid=(bs_pad // tb,),
            in_specs=[
                pl.BlockSpec((tb, 1), lambda i: (i, 0)),          # tag rows
                pl.BlockSpec((tb, H), lambda i: (i, 0)),          # hidden rows
                pl.BlockSpec((H, t_pad), lambda i: (0, 0)),       # W_h (resident)
                pl.BlockSpec((n_tags, t_pad), lambda i: (0, 0)),  # R   (resident)
            ],
            out_specs=pl.BlockSpec((tb, T), lambda i: (i, 0)),
        ),
        compiler_params=pltpu.CompilerParams(
            dimension_semantics=("parallel",)),
    )(tag_2d, hidden_2d, wh_pad, r_pad)

    if bs_pad != BS:
        out = out[:BS]
    return out.reshape(B, S, T)


# ---------------------------------------------------------------------------
# Pure-JAX f32 reference (mirrors the PyTorch forward) for correctness check
# ---------------------------------------------------------------------------
def reference_forward(hidden, tag, params):
    tag_emb = params["tag_emb"][tag]                               # (B, S, P)
    x = jnp.concatenate([hidden, tag_emb], axis=-1)                # (B, S, H+P)
    return x @ params["w"].T + params["b"]                         # (B, S, T)


# ---------------------------------------------------------------------------
# Deterministic parameter initialization (shapes follow the module __init__)
# ---------------------------------------------------------------------------
def init_params(key, hidden_dim, tagset_size, project_dim):
    k1, k2, k3 = jax.random.split(key, 3)
    fan_in = hidden_dim + project_dim
    bound = 1.0 / math.sqrt(fan_in)
    return dict(
        tag_emb=jax.random.normal(k1, (tagset_size, project_dim), jnp.float32),
        w=jax.random.uniform(k2, (tagset_size, fan_in), jnp.float32,
                             -bound, bound),
        b=jax.random.uniform(k3, (tagset_size,), jnp.float32, -bound, bound),
    )


if __name__ == "__main__":
    key = jax.random.PRNGKey(0)
    B, S = 2, 8
    hidden_dim, project_dim, tagset_size = 32, 16, 8

    pkey, hkey, tkey = jax.random.split(key, 3)
    params = init_params(pkey, hidden_dim, tagset_size, project_dim)
    hidden = jax.random.normal(hkey, (B, S, hidden_dim), jnp.float32)
    tag = jax.random.randint(tkey, (B, S), 0, tagset_size)

    prep = prepare_params(params)                 # one-time, off the hot path
    out = pallas_forward(hidden, tag, prep, is_train=False)
    out = jax.block_until_ready(out)

    ref = reference_forward(hidden, tag, params)
    assert out.shape == (B, S, tagset_size), out.shape
    assert bool(jnp.all(jnp.isfinite(out)))
    # bf16 MXU operands (f32 accumulation): tolerance sized for bf16 rounding.
    assert bool(jnp.allclose(out, ref, atol=2e-2, rtol=2e-2)), (
        float(jnp.max(jnp.abs(out - ref))))
    print("KERNEL_OK")
</pallas_src>

<mosaic_0001>
module attributes {stable_mosaic.version = 11 : i64} {
  func.func @_seq_correct_kernel(%arg0: i32, %arg1: memref<16x1xi32, #tpu.memory_space<vmem>>, %arg2: memref<16x32xbf16, #tpu.memory_space<vmem>>, %arg3: memref<32x128xbf16, #tpu.memory_space<vmem>>, %arg4: memref<8x128xbf16, #tpu.memory_space<vmem>>, %arg5: memref<16x8xf32, #tpu.memory_space<vmem>>) attributes {dimension_semantics = [#tpu.dimension_semantics<parallel>], iteration_bounds = array<i64: 1>, scalar_prefetch = 0 : i64, scratch_operands = 0 : i64, tpu.core_type = #tpu.core_type<tc>, window_params = [{transform_indices = @transform_0, window_bounds = array<i64: 16, 1>}, {transform_indices = @transform_1, window_bounds = array<i64: 16, 32>}, {pipeline_mode = #tpu.pipeline_mode<synchronous>, transform_indices = @transform_2, window_bounds = array<i64: 32, 128>}, {pipeline_mode = #tpu.pipeline_mode<synchronous>, transform_indices = @transform_3, window_bounds = array<i64: 8, 128>}, {transform_indices = @transform_4, window_bounds = array<i64: 16, 8>}]} {
    %c0 = arith.constant 0 : index
    %c0_0 = arith.constant 0 : index
    %0 = vector.load %arg1[%c0, %c0_0] : memref<16x1xi32, #tpu.memory_space<vmem>>, vector<16x1xi32>
    %1 = tpu.iota {dimensions = array<i32: 1>} : vector<16x8xi32>
    %2 = vector.broadcast %0 : vector<16x1xi32> to vector<16x8xi32>
    %3 = arith.cmpi eq, %1, %2 : vector<16x8xi32>
    %cst = arith.constant 1.000000e+00 : f32
    %cst_1 = arith.constant 0.000000e+00 : f32
    %4 = vector.broadcast %cst : f32 to vector<16x8xf32>
    %5 = vector.broadcast %cst_1 : f32 to vector<16x8xf32>
    %6 = arith.select %3, %4, %5 : vector<16x8xi1>, vector<16x8xf32>
    %7 = arith.truncf %6 : vector<16x8xf32> to vector<16x8xbf16>
    %c0_2 = arith.constant 0 : index
    %c0_3 = arith.constant 0 : index
    %8 = vector.load %arg2[%c0_2, %c0_3] : memref<16x32xbf16, #tpu.memory_space<vmem>>, vector<16x32xbf16>
    %c0_4 = arith.constant 0 : index
    %c0_5 = arith.constant 0 : index
    %9 = vector.load %arg3[%c0_4, %c0_5] : memref<32x128xbf16, #tpu.memory_space<vmem>>, vector<32x128xbf16>
    %cst_6 = arith.constant dense<0.000000e+00> : vector<16x128xf32>
    %10 = tpu.matmul %8, %9, %cst_6 {dimension_numbers = #tpu.dot_dimension_numbers<[1], [0], [0], [1], [0, 0, 1, 1], [], []>} : vector<16x32xbf16>, vector<32x128xbf16>, vector<16x128xf32> -> vector<16x128xf32>
    %c0_7 = arith.constant 0 : index
    %c0_8 = arith.constant 0 : index
    %11 = vector.load %arg4[%c0_7, %c0_8] : memref<8x128xbf16, #tpu.memory_space<vmem>>, vector<8x128xbf16>
    %cst_9 = arith.constant dense<0.000000e+00> : vector<16x128xf32>
    %12 = tpu.matmul %7, %11, %cst_9 {dimension_numbers = #tpu.dot_dimension_numbers<[1], [0], [0], [1], [0, 0, 1, 1], [], []>} : vector<16x8xbf16>, vector<8x128xbf16>, vector<16x128xf32> -> vector<16x128xf32>
    %13 = arith.addf %10, %12 : vector<16x128xf32>
    %14 = vector.extract_strided_slice %13 {offsets = [0, 0], sizes = [16, 8], strides = [1, 1]} : vector<16x128xf32> to vector<16x8xf32>
    %c0_10 = arith.constant 0 : index
    %c0_11 = arith.constant 0 : index
    %15 = vector.load %arg5[%c0_10, %c0_11] : memref<16x8xf32, #tpu.memory_space<vmem>>, vector<16x8xf32>
    tpu.vector_store %arg5[%c0_10, %c0_11], %14 {strides = array<i32>} : memref<16x8xf32, #tpu.memory_space<vmem>>, vector<16x8xf32>,
    return
  }
  func.func @transform_0(%arg0: i32) -> (i32, i32) {
    %c0_i32 = arith.constant 0 : i32
    %c0_i32_0 = arith.constant 0 : i32
    return %arg0, %c0_i32 : i32, i32
  }
  func.func @transform_1(%arg0: i32) -> (i32, i32) {
    %c0_i32 = arith.constant 0 : i32
    %c0_i32_0 = arith.constant 0 : i32
    return %arg0, %c0_i32 : i32, i32
  }
  func.func @transform_2(%arg0: i32) -> (i32, i32) {
    %c0_i32 = arith.constant 0 : i32
    %c0_i32_0 = arith.constant 0 : i32
    %c0_i32_1 = arith.constant 0 : i32
    return %c0_i32, %c0_i32_0 : i32, i32
  }
  func.func @transform_3(%arg0: i32) -> (i32, i32) {
    %c0_i32 = arith.constant 0 : i32
    %c0_i32_0 = arith.constant 0 : i32
    %c0_i32_1 = arith.constant 0 : i32
    return %c0_i32, %c0_i32_0 : i32, i32
  }
  func.func @transform_4(%arg0: i32) -> (i32, i32) {
    %c0_i32 = arith.constant 0 : i32
    %c0_i32_0 = arith.constant 0 : i32
    return %arg0, %c0_i32 : i32, i32
  }
}

</mosaic_0001>

<llo_original>
// kernel: tpu_custom_call.1
$region0: #{tpu_custom_call.1}
  #allocation0 [shape = 'u32[]', space=smem, size = 0x4, offset = 0x4, fixed_abs, tag = 'smem constant byte address 0x4 - core index']
  #allocation1 [shape = 'u32[144,128]{1,0:T(1,128)}', space=vmem, size = 0x12000, scoped, tag = 'internal scratch']
  %s0 = inlined_call_operand.vmem [shape: s32[16,1], index: 0, kind: input, shape index: {}]
  %s1 = inlined_call_operand.vmem [shape: bf16[16,32], index: 1, kind: input, shape index: {}]
  %s2 = inlined_call_operand.vmem [shape: bf16[32,128], index: 2, kind: input, shape index: {}]
  %s3 = inlined_call_operand.vmem [shape: bf16[8,128], index: 3, kind: input, shape index: {}]
  %s4 = inlined_call_operand.vmem [shape: f32[16,8], index: 4, kind: output, shape index: {}]
  %s5 = sld [smem:[#allocation0]]
  $region26: #{tpu_custom_call.1} parent=0
    _
  %s7 = ssub.s32 1, %s5
  %s8 = scalar_select 0, %s7, %s5
  // Predicated region
  $region2: #{tpu_custom_call.1} parent=0 // pred_check
    _
  $region3: #{tpu_custom_call.1} parent=0 // pred_check_branch
    %10 = sbr.rel (0) target = $region5
  $region4: #{tpu_custom_call.1} parent=0 // pred_region
    _
  $region5: #{tpu_custom_call.1} parent=0 // pred_fallthru
    _
  // Predicated region
  $region6: #{tpu_custom_call.1} parent=0 // pred_check
    _
  $region7: #{tpu_custom_call.1} parent=0 // pred_check_branch
    %12 = sbr.rel (0) target = $region9
  $region8: #{tpu_custom_call.1} parent=0 // pred_region
    _
  $region9: #{tpu_custom_call.1} parent=0 // pred_fallthru
    _
  // Predicated region
  $region10: #{tpu_custom_call.1} parent=0 // pred_check
    _
  $region11: #{tpu_custom_call.1} parent=0 // pred_check_branch
    %14 = sbr.rel (0) target = $region13
  $region12: #{tpu_custom_call.1} parent=0 // pred_region
    _
  $region13: #{tpu_custom_call.1} parent=0 // pred_fallthru
    _
  // Predicated region
  $region14: #{tpu_custom_call.1} parent=0 // pred_check
    _
  $region15: #{tpu_custom_call.1} parent=0 // pred_check_branch
    %16 = sbr.rel (0) target = $region17
  $region16: #{tpu_custom_call.1} parent=0 // pred_region
    _
  $region17: #{tpu_custom_call.1} parent=0 // pred_fallthru
    _
  %v18 = vld [vmem:[%s0] sm:$0xff]
  %v19 = vld [vmem:[%s0 + $0x8] sm:$0xff]
  %v20 = vlaneseq
  %v21 = vand.u32 %v20, 127
  %22 = vset.pattern.permute.xlu0 0
  %23 = vperm.xlu0 %22, %v18
  %v24 = vpop.permute.xlu0 %23
  %25 = vset.pattern.permute.xlu0 0
  %26 = vperm.xlu0 %25, %v19
  %v27 = vpop.permute.xlu0 %26
  %vm28 = vcmp.eq.s32.totalorder %v21, %v24
  %vm29 = vcmp.eq.s32.totalorder %v21, %v27
  %v30 = vsel %vm28, 1.0, 0.0
  %v31 = vsel %vm29, 1.0, 0.0
  %v32 = vpack.c.bf16 %v31, %v30
  %v33 = vld [vmem:[%s1] sm:$0xf]
  %v34 = vld [vmem:[%s1 + $0x4] sm:$0xf]
  %v35 = vld [vmem:[%s2] sm:$0xf]
  %v36 = vld [vmem:[%s2 + $0x4] sm:$0xf]
  %v37 = vld [vmem:[%s2 + $0x8] sm:$0xf]
  %v38 = vld [vmem:[%s2 + $0xc] sm:$0xf]
  %v39 = vld [vmem:[%s3] sm:$0xf]
  %vm40 = vcmask 64512
  %v42 = vsel %vm40, %v32, 0
  %vm44 = vcmask 1043456
  %v46 = vsel %vm44, %v39, 0
  %48 = vmatprep.subr.bf16.mxu0 0
  %49 = vmatpush1.bf16.msra.mxu0 %v46
  %50 = vmatprep.subr.bf16.mxu0 0
  %51 = vmatpush1.bf16.msra.mxu0 0
  %52 = vmatprep.subr.bf16.mxu0 0
  %53 = vmatpush1.bf16.msra.mxu0 0
  %54 = vmatprep.subr.bf16.mxu0 0
  %55 = vmatpush1.bf16.msra.mxu0 0
  %56 = vmatprep.subr.bf16.mxu0 0
  %57 = vmatpush1.bf16.msra.mxu0 0
  %58 = vmatprep.subr.bf16.mxu0 0
  %59 = vmatpush1.bf16.msra.mxu0 0
  %60 = vmatprep.subr.bf16.mxu0 0
  %61 = vmatpush1.bf16.msra.mxu0 0
  %62 = vmatprep.subr.bf16.mxu0 0
  %63 = vmatpush1.bf16.msra.mxu0 0
  %64 = vmatprep.subr.bf16.mxu0 0
  %65 = vmatpush1.bf16.msra.mxu0 0
  %66 = vmatprep.subr.bf16.mxu0 0
  %67 = vmatpush1.bf16.msra.mxu0 0
  %68 = vmatprep.subr.bf16.mxu0 0
  %69 = vmatpush1.bf16.msra.mxu0 0
  %70 = vmatprep.subr.bf16.mxu0 0
  %71 = vmatpush1.bf16.msra.mxu0 0
  %72 = vmatprep.subr.bf16.mxu0 0
  %73 = vmatpush1.bf16.msra.mxu0 0
  %74 = vmatprep.subr.bf16.mxu0 0
  %75 = vmatpush1.bf16.msra.mxu0 0
  %76 = vmatprep.subr.bf16.mxu0 0
  %77 = vmatpush1.bf16.msra.mxu0 0
  %78 = vmatprep.subr.bf16.mxu0 0
  %79 = vmatpush1.bf16.msra.mxu0 0
  %80 = vmatprep.mubr.bf16.mxu0 0
  %81 = vmatmul.mubr.bf16.gmra.mrb[0].mxu0 %v42
  %v82 = vpop.f32.mrb[0].mxu0
  %v83 = vadd.f32 0.0, %v82
  %v84 = vpop.f32.mrb[0].mxu0
  %v85 = vpop.f32.mrb[0].mxu0
  %v86 = vadd.f32 0.0, %v85
  %v87 = vpop.f32.mrb[0].mxu0
  %88 = vdwg.mxu0
  %v91 = vunpack.c.l.b16 %v33
  %v92 = vunpack.c.l.b16 %v34
  %v93 = vpack.c.b16 %v92, %v91
  %v98 = vunpack.c.l.b16 %v35
  %v99 = vunpack.c.l.b16 %v36
  %v100 = vunpack.c.l.b16 %v37
  %v101 = vunpack.c.l.b16 %v38
  %v102 = vpack.c.b16 %v99, %v98
  %v103 = vpack.c.b16 %v101, %v100
  %vm106 = vcmask 261120
  %v108 = vsel %vm106, %v93, 0
  %110 = vmatprep.subr.bf16.mxu0 0
  %111 = vmatpush1.bf16.msra.mxu0 %v102
  %112 = vmatprep.subr.bf16.mxu0 0
  %113 = vmatpush1.bf16.msra.mxu0 %v103
  %114 = vmatprep.subr.bf16.mxu0 0
  %115 = vmatpush1.bf16.msra.mxu0 0
  %116 = vmatprep.subr.bf16.mxu0 0
  %117 = vmatpush1.bf16.msra.mxu0 0
  %118 = vmatprep.subr.bf16.mxu0 0
  %119 = vmatpush1.bf16.msra.mxu0 0
  %120 = vmatprep.subr.bf16.mxu0 0
  %121 = vmatpush1.bf16.msra.mxu0 0
  %122 = vmatprep.subr.bf16.mxu0 0
  %123 = vmatpush1.bf16.msra.mxu0 0
  %124 = vmatprep.subr.bf16.mxu0 0
  %125 = vmatpush1.bf16.msra.mxu0 0
  %126 = vmatprep.subr.bf16.mxu0 0
  %127 = vmatpush1.bf16.msra.mxu0 0
  %128 = vmatprep.subr.bf16.mxu0 0
  %129 = vmatpush1.bf16.msra.mxu0 0
  %130 = vmatprep.subr.bf16.mxu0 0
  %131 = vmatpush1.bf16.msra.mxu0 0
  %132 = vmatprep.subr.bf16.mxu0 0
  %133 = vmatpush1.bf16.msra.mxu0 0
  %134 = vmatprep.subr.bf16.mxu0 0
  %135 = vmatpush1.bf16.msra.mxu0 0
  %136 = vmatprep.subr.bf16.mxu0 0
  %137 = vmatpush1.bf16.msra.mxu0 0
  %138 = vmatprep.subr.bf16.mxu0 0
  %139 = vmatpush1.bf16.msra.mxu0 0
  %140 = vmatprep.subr.bf16.mxu0 0
  %141 = vmatpush1.bf16.msra.mxu0 0
  %142 = vmatprep.mubr.bf16.mxu0 0
  %143 = vmatmul.mubr.bf16.gmra.mrb[0].mxu0 %v108
  %v144 = vpop.f32.mrb[0].mxu0
  %v145 = vadd.f32 %v83, %v144
  %v146 = vpop.f32.mrb[0].mxu0
  %v147 = vpop.f32.mrb[0].mxu0
  %v148 = vadd.f32 %v86, %v147
  %v149 = vpop.f32.mrb[0].mxu0
  %150 = vdwg.mxu0
  %151 = vst.msk [vmem:[%s4] sm:$0xff] %vm40, %v145
  %152 = vst.msk [vmem:[%s4 + $0x8] sm:$0xff] %vm40, %v148
  // Predicated region
  $region18: #{tpu_custom_call.1} parent=0 // pred_check
    _
  $region19: #{tpu_custom_call.1} parent=0 // pred_check_branch
    %154 = sbr.rel (0) target = $region21
  $region20: #{tpu_custom_call.1} parent=0 // pred_region
    _
  $region21: #{tpu_custom_call.1} parent=0 // pred_fallthru
    _
  // Predicated region
  $region22: #{tpu_custom_call.1} parent=0 // pred_check
    _
  $region23: #{tpu_custom_call.1} parent=0 // pred_check_branch
    %156 = sbr.rel (0) target = $region25
  $region24: #{tpu_custom_call.1} parent=0 // pred_region
    _
  $region25: #{tpu_custom_call.1} parent=0 // pred_fallthru
    _

</llo_original>
